<compile_context>
chip_gen: v7x
topology: tpu7x:2x2x1
jax: 0.10.0
libtpu: 0.0.40
codegen_flags: <defaults>
</compile_context>

<pallas_src>
import jax
import jax.numpy as jnp
import numpy as np
from jax import lax
from jax.experimental import pallas as pl
from jax.experimental.pallas import tpu as pltpu


def _self_attn_kernel(xq_ref, x_ref, m_ref, u_ref, wv_ref, bv_ref, gamma_ref,
                      out_ref, attn_ref, z_scr, ub_scr, v_scr):
    # ---- per-batch precompute (key/value side), once per batch element ----
    @pl.when(pl.program_id(1) == 0)
    def _():
        x = x_ref[0]                                                # (C, N)
        z_scr[...] = jnp.dot(m_ref[...], x,
                             preferred_element_type=jnp.float32)    # (C, N)
        ub_scr[...] = jnp.dot(u_ref[...], x,
                              preferred_element_type=jnp.float32)   # (1, N)
        v_scr[...] = jnp.dot(wv_ref[...], x,
                             preferred_element_type=jnp.float32) + bv_ref[...]

    xq = xq_ref[0]                                                  # (C, tq)

    # energy[i, j] = x_i^T M x_j + (Wk^T bq) . x_j
    # (row-constant terms dropped -- they cancel in the softmax)
    energy = lax.dot_general(xq, z_scr[...], (((0,), (0,)), ((), ())),
                             preferred_element_type=jnp.float32)    # (tq, N)
    energy = energy + ub_scr[...]                                   # + (1, N)

    # numerically stable softmax over keys (last axis)
    mx = jnp.max(energy, axis=-1, keepdims=True)
    e = jnp.exp(energy - mx)
    denom = jnp.sum(e, axis=-1, keepdims=True)
    attn = e * pl.reciprocal(denom, approx=False)                   # (tq, N)
    attn_ref[0] = attn

    # ctx[c, i] = sum_j v[c, j] * attn[i, j]   (A @ B^T form, MXU-native)
    ctx = lax.dot_general(v_scr[...], attn, (((1,), (1,)), ((), ())),
                          preferred_element_type=jnp.float32)       # (C, tq)
    out_ref[0] = gamma_ref[0, 0] * ctx + xq


def _vmem_footprint(n, c, tq):
    """Rough per-step VMEM bytes: double-buffered x/xq/out/attn blocks + scratch."""
    dbl = 8 * (c * n + 2 * c * tq + tq * n)            # f32, 2 buffers each
    fixed = 4 * (2 * c * n + n + 2 * c * c + 3 * c)    # z/v/ub scratch + weights
    return dbl + fixed


def _pick_tq(n, c, vmem_budget=40 * 1024 * 1024):
    """Query-tile size: divides N, (multiple of 8 or == N), prefers multiples
    of 128 (lane-dense stores), keeps the per-step VMEM footprint in budget."""
    cands = [t for t in range(1, n + 1)
             if n % t == 0 and (t == n or t % 8 == 0)
             and _vmem_footprint(n, c, t) <= vmem_budget]
    if not cands:
        return min(t for t in range(1, n + 1)
                   if n % t == 0 and (t == n or t % 8 == 0))
    m128 = [t for t in cands if t % 128 == 0]
    return max(m128) if m128 else max(cands)


def self_attn_pallas(x_nchw, wq, bq, wk, bk, wv, bv, gamma):
    """x_nchw: (B, C, W, H) float32.  Returns (out (B,C,W,H), attention (B,N,N))."""
    B, C, W, H = x_nchw.shape
    N = W * H
    f32 = jnp.float32

    x_bcn = x_nchw.reshape(B, C, N).astype(f32)          # pure reshape (no transpose)

    wq_f = wq.astype(f32)
    wk_f = wk.astype(f32)
    wv_f = wv.astype(f32)
    M = wq_f.T @ wk_f                                    # (C, C)   fused Q/K energy
    u_row = (wk_f.T @ bq.astype(f32)).reshape(1, C)      # (1, C)   key-side bias term
    bv_col = bv.astype(f32).reshape(C, 1)
    gamma2 = jnp.asarray(gamma, f32).reshape(1, 1)

    tq = _pick_tq(N, C)
    n_q = N // tq
    vmem_limit = int(min(64 * 1024 * 1024,
                         max(32 * 1024 * 1024, 1.5 * _vmem_footprint(N, C, tq))))

    out_bcn, attn = pl.pallas_call(
        _self_attn_kernel,
        out_shape=(
            jax.ShapeDtypeStruct((B, C, N), f32),
            jax.ShapeDtypeStruct((B, N, N), f32),
        ),
        grid_spec=pltpu.PrefetchScalarGridSpec(
            num_scalar_prefetch=0,
            grid=(B, n_q),
            in_specs=[
                pl.BlockSpec((1, C, tq), lambda b, q: (b, 0, q)),   # x: query tile
                pl.BlockSpec((1, C, N), lambda b, q: (b, 0, 0)),    # x: full (keys/values)
                pl.BlockSpec((C, C), lambda b, q: (0, 0)),          # M = Wq^T Wk
                pl.BlockSpec((1, C), lambda b, q: (0, 0)),          # u = Wk^T bq
                pl.BlockSpec((C, C), lambda b, q: (0, 0)),          # Wv
                pl.BlockSpec((C, 1), lambda b, q: (0, 0)),          # bv
                pl.BlockSpec(memory_space=pltpu.SMEM),              # gamma scalar
            ],
            out_specs=[
                pl.BlockSpec((1, C, tq), lambda b, q: (b, 0, q)),   # out (BCN layout)
                pl.BlockSpec((1, tq, N), lambda b, q: (b, q, 0)),   # attention
            ],
            scratch_shapes=[
                pltpu.VMEM((C, N), f32),    # z  = M x
                pltpu.VMEM((1, N), f32),    # ub = u . x
                pltpu.VMEM((C, N), f32),    # v  = Wv x + bv
            ],
        ),
        compiler_params=pltpu.CompilerParams(
            dimension_semantics=("parallel", "arbitrary"),
            vmem_limit_bytes=vmem_limit),
    )(x_bcn, x_bcn, M, u_row, wv_f, bv_col, gamma2)

    return out_bcn.reshape(B, C, W, H), attn


def self_attn_reference(x_nchw, wq, bq, wk, bk, wv, bv, gamma):
    """Pure-JAX reference mirroring the PyTorch forward exactly (non-fused)."""
    B, C, W, H = x_nchw.shape
    N = W * H
    xf = x_nchw.reshape(B, C, N)
    q = jnp.einsum('oc,bcn->bon', wq, xf) + bq[None, :, None]
    k = jnp.einsum('oc,bcn->bon', wk, xf) + bk[None, :, None]
    v = jnp.einsum('oc,bcn->bon', wv, xf) + bv[None, :, None]
    energy = jnp.einsum('bci,bcj->bij', q, k)                 # (B, N, N)
    attn = jax.nn.softmax(energy, axis=-1)
    out = jnp.einsum('bcj,bij->bci', v, attn)                 # (B, C, N)
    out = gamma * out + xf
    return out.reshape(B, C, W, H), attn


if __name__ == "__main__":
    # Small shapes consistent with the module (in_channels >= 8 so C//8 >= 1).
    B, C, W, H = 2, 16, 8, 8
    Cq = C // 8

    key = jax.random.PRNGKey(0)
    k_x, k_wq, k_bq, k_wk, k_bk, k_wv, k_bv = jax.random.split(key, 7)

    x = jax.random.normal(k_x, (B, C, W, H), jnp.float32)

    # Conv2d 1x1 weights are (out_ch, in_ch).
    wq = jax.random.normal(k_wq, (Cq, C), jnp.float32) * 0.1
    bq = jax.random.normal(k_bq, (Cq,), jnp.float32) * 0.1
    wk = jax.random.normal(k_wk, (Cq, C), jnp.float32) * 0.1
    bk = jax.random.normal(k_bk, (Cq,), jnp.float32) * 0.1
    wv = jax.random.normal(k_wv, (C, C), jnp.float32) * 0.1
    bv = jax.random.normal(k_bv, (C,), jnp.float32) * 0.1
    # PyTorch initializes gamma to 0; use a nonzero value so the attention
    # output path is actually exercised.
    gamma = jnp.float32(0.5)

    out, attn = self_attn_pallas(x, wq, bq, wk, bk, wv, bv, gamma)
    jax.block_until_ready((out, attn))

    out_ref, attn_ref = self_attn_reference(x, wq, bq, wk, bk, wv, bv, gamma)
    np.testing.assert_allclose(np.asarray(attn), np.asarray(attn_ref),
                               rtol=1e-4, atol=1e-5)
    np.testing.assert_allclose(np.asarray(out), np.asarray(out_ref),
                               rtol=1e-4, atol=1e-5)

    print("KERNEL_OK")
</pallas_src>

<mosaic_0001>
module attributes {stable_mosaic.version = 11 : i64} {
  func.func @_self_attn_kernel(%arg0: i32, %arg1: i32, %arg2: memref<1x16x64xf32, #tpu.memory_space<vmem>>, %arg3: memref<1x16x64xf32, #tpu.memory_space<vmem>>, %arg4: memref<16x16xf32, #tpu.memory_space<vmem>>, %arg5: memref<1x16xf32, #tpu.memory_space<vmem>>, %arg6: memref<16x16xf32, #tpu.memory_space<vmem>>, %arg7: memref<16x1xf32, #tpu.memory_space<vmem>>, %arg8: memref<1x1xf32, #tpu.memory_space<smem>>, %arg9: memref<1x16x64xf32, #tpu.memory_space<vmem>>, %arg10: memref<1x64x64xf32, #tpu.memory_space<vmem>>, %arg11: memref<16x64xf32, #tpu.memory_space<vmem>>, %arg12: memref<1x64xf32, #tpu.memory_space<vmem>>, %arg13: memref<16x64xf32, #tpu.memory_space<vmem>>) attributes {dimension_semantics = [#tpu.dimension_semantics<parallel>, #tpu.dimension_semantics<arbitrary>], iteration_bounds = array<i64: 2, 1>, scalar_prefetch = 0 : i64, scratch_operands = 3 : i64, tpu.core_type = #tpu.core_type<tc>, window_params = [{transform_indices = @transform_0, window_bounds = array<i64: 1, 16, 64>}, {transform_indices = @transform_1, window_bounds = array<i64: 1, 16, 64>}, {pipeline_mode = #tpu.pipeline_mode<synchronous>, transform_indices = @transform_2, window_bounds = array<i64: 16, 16>}, {pipeline_mode = #tpu.pipeline_mode<synchronous>, transform_indices = @transform_3, window_bounds = array<i64: 1, 16>}, {pipeline_mode = #tpu.pipeline_mode<synchronous>, transform_indices = @transform_4, window_bounds = array<i64: 16, 16>}, {pipeline_mode = #tpu.pipeline_mode<synchronous>, transform_indices = @transform_5, window_bounds = array<i64: 16, 1>}, {transform_indices = @transform_6, window_bounds = array<i64: 1, 1>}, {transform_indices = @transform_7, window_bounds = array<i64: 1, 16, 64>}, {transform_indices = @transform_8, window_bounds = array<i64: 1, 64, 64>}]} {
    %c0_i32 = arith.constant 0 : i32
    %0 = arith.cmpi eq, %arg1, %c0_i32 : i32
    %1 = arith.extui %0 : i1 to i32
    %c0_i32_0 = arith.constant 0 : i32
    %2 = arith.cmpi ne, %1, %c0_i32_0 : i32
    scf.if %2 {
      %c0_20 = arith.constant 0 : index
      %c0_21 = arith.constant 0 : index
      %c0_22 = arith.constant 0 : index
      %32 = vector.load %arg3[%c0_20, %c0_21, %c0_22] : memref<1x16x64xf32, #tpu.memory_space<vmem>>, vector<1x16x64xf32>
      %33 = vector.shape_cast %32 : vector<1x16x64xf32> to vector<16x64xf32>
      %c0_23 = arith.constant 0 : index
      %c0_24 = arith.constant 0 : index
      %34 = vector.load %arg4[%c0_23, %c0_24] : memref<16x16xf32, #tpu.memory_space<vmem>>, vector<16x16xf32>
      %cst_25 = arith.constant dense<0.000000e+00> : vector<16x64xf32>
      %35 = tpu.matmul %34, %33, %cst_25 {dimension_numbers = #tpu.dot_dimension_numbers<[1], [0], [0], [1], [0, 0, 1, 1], [], []>} : vector<16x16xf32>, vector<16x64xf32>, vector<16x64xf32> -> vector<16x64xf32>
      %c0_26 = arith.constant 0 : index
      %c0_27 = arith.constant 0 : index
      %36 = vector.load %arg11[%c0_26, %c0_27] : memref<16x64xf32, #tpu.memory_space<vmem>>, vector<16x64xf32>
      tpu.vector_store %arg11[%c0_26, %c0_27], %35 {strides = array<i32>} : memref<16x64xf32, #tpu.memory_space<vmem>>, vector<16x64xf32>,
      %c0_28 = arith.constant 0 : index
      %c0_29 = arith.constant 0 : index
      %37 = vector.load %arg5[%c0_28, %c0_29] : memref<1x16xf32, #tpu.memory_space<vmem>>, vector<1x16xf32>
      %cst_30 = arith.constant dense<0.000000e+00> : vector<1x64xf32>
      %38 = tpu.matmul %37, %33, %cst_30 {dimension_numbers = #tpu.dot_dimension_numbers<[1], [0], [0], [1], [0, 0, 1, 1], [], []>} : vector<1x16xf32>, vector<16x64xf32>, vector<1x64xf32> -> vector<1x64xf32>
      %c0_31 = arith.constant 0 : index
      %c0_32 = arith.constant 0 : index
      %39 = vector.load %arg12[%c0_31, %c0_32] : memref<1x64xf32, #tpu.memory_space<vmem>>, vector<1x64xf32>
      tpu.vector_store %arg12[%c0_31, %c0_32], %38 {strides = array<i32>} : memref<1x64xf32, #tpu.memory_space<vmem>>, vector<1x64xf32>,
      %c0_33 = arith.constant 0 : index
      %c0_34 = arith.constant 0 : index
      %40 = vector.load %arg6[%c0_33, %c0_34] : memref<16x16xf32, #tpu.memory_space<vmem>>, vector<16x16xf32>
      %cst_35 = arith.constant dense<0.000000e+00> : vector<16x64xf32>
      %41 = tpu.matmul %40, %33, %cst_35 {dimension_numbers = #tpu.dot_dimension_numbers<[1], [0], [0], [1], [0, 0, 1, 1], [], []>} : vector<16x16xf32>, vector<16x64xf32>, vector<16x64xf32> -> vector<16x64xf32>
      %c0_36 = arith.constant 0 : index
      %c0_37 = arith.constant 0 : index
      %42 = vector.load %arg7[%c0_36, %c0_37] : memref<16x1xf32, #tpu.memory_space<vmem>>, vector<16x1xf32>
      %43 = vector.broadcast %42 : vector<16x1xf32> to vector<16x64xf32>
      %44 = arith.addf %41, %43 : vector<16x64xf32>
      %c0_38 = arith.constant 0 : index
      %c0_39 = arith.constant 0 : index
      %45 = vector.load %arg13[%c0_38, %c0_39] : memref<16x64xf32, #tpu.memory_space<vmem>>, vector<16x64xf32>
      tpu.vector_store %arg13[%c0_38, %c0_39], %44 {strides = array<i32>} : memref<16x64xf32, #tpu.memory_space<vmem>>, vector<16x64xf32>,
    } else {
    }
    %c0 = arith.constant 0 : index
    %c0_1 = arith.constant 0 : index
    %c0_2 = arith.constant 0 : index
    %3 = vector.load %arg2[%c0, %c0_1, %c0_2] : memref<1x16x64xf32, #tpu.memory_space<vmem>>, vector<1x16x64xf32>
    %4 = vector.shape_cast %3 : vector<1x16x64xf32> to vector<16x64xf32>
    %c0_3 = arith.constant 0 : index
    %c0_4 = arith.constant 0 : index
    %5 = vector.load %arg11[%c0_3, %c0_4] : memref<16x64xf32, #tpu.memory_space<vmem>>, vector<16x64xf32>
    %cst = arith.constant dense<0.000000e+00> : vector<64x64xf32>
    %6 = tpu.matmul %4, %5, %cst {dimension_numbers = #tpu.dot_dimension_numbers<[0], [0], [1], [1], [0, 1, 1, 1], [], []>} : vector<16x64xf32>, vector<16x64xf32>, vector<64x64xf32> -> vector<64x64xf32>
    %c0_5 = arith.constant 0 : index
    %c0_6 = arith.constant 0 : index
    %7 = vector.load %arg12[%c0_5, %c0_6] : memref<1x64xf32, #tpu.memory_space<vmem>>, vector<1x64xf32>
    %8 = vector.broadcast %7 : vector<1x64xf32> to vector<64x64xf32>
    %9 = arith.addf %6, %8 : vector<64x64xf32>
    %cst_7 = arith.constant dense<0xFF800000> : vector<64xf32>
    %10 = vector.multi_reduction <maximumf>, %9, %cst_7 [1] : vector<64x64xf32> to vector<64xf32>
    %11 = vector.shape_cast %10 : vector<64xf32> to vector<64x1xf32>
    %12 = vector.broadcast %11 : vector<64x1xf32> to vector<64x64xf32>
    %13 = arith.subf %9, %12 : vector<64x64xf32>
    %14 = math.exp %13 : vector<64x64xf32>
    %cst_8 = arith.constant dense<0.000000e+00> : vector<64xf32>
    %15 = vector.multi_reduction <add>, %14, %cst_8 [1] : vector<64x64xf32> to vector<64xf32>
    %16 = vector.shape_cast %15 : vector<64xf32> to vector<64x1xf32>
    %17 = tpu.reciprocal %16 : vector<64x1xf32> -> vector<64x1xf32>
    %18 = vector.broadcast %17 : vector<64x1xf32> to vector<64x64xf32>
    %19 = arith.mulf %14, %18 : vector<64x64xf32>
    %c0_9 = arith.constant 0 : index
    %c0_10 = arith.constant 0 : index
    %c0_11 = arith.constant 0 : index
    %20 = vector.load %arg10[%c0_9, %c0_10, %c0_11] : memref<1x64x64xf32, #tpu.memory_space<vmem>>, vector<1x64x64xf32>
    %21 = vector.shape_cast %20 : vector<1x64x64xf32> to vector<64x64xf32>
    %22 = vector.shape_cast %19 : vector<64x64xf32> to vector<1x64x64xf32>
    tpu.vector_store %arg10[%c0_9, %c0_10, %c0_11], %22 {strides = array<i32>} : memref<1x64x64xf32, #tpu.memory_space<vmem>>, vector<1x64x64xf32>,
    %c0_12 = arith.constant 0 : index
    %c0_13 = arith.constant 0 : index
    %23 = vector.load %arg13[%c0_12, %c0_13] : memref<16x64xf32, #tpu.memory_space<vmem>>, vector<16x64xf32>
    %cst_14 = arith.constant dense<0.000000e+00> : vector<16x64xf32>
    %24 = tpu.matmul %23, %19, %cst_14 {dimension_numbers = #tpu.dot_dimension_numbers<[1], [1], [0], [0], [0, 0, 1, 0], [], []>} : vector<16x64xf32>, vector<64x64xf32>, vector<16x64xf32> -> vector<16x64xf32>
    %c0_15 = arith.constant 0 : index
    %c0_16 = arith.constant 0 : index
    %25 = memref.load %arg8[%c0_15, %c0_16] : memref<1x1xf32, #tpu.memory_space<smem>>
    %26 = vector.broadcast %25 : f32 to vector<16x64xf32>
    %27 = arith.mulf %26, %24 : vector<16x64xf32>
    %28 = arith.addf %27, %4 : vector<16x64xf32>
    %c0_17 = arith.constant 0 : index
    %c0_18 = arith.constant 0 : index
    %c0_19 = arith.constant 0 : index
    %29 = vector.load %arg9[%c0_17, %c0_18, %c0_19] : memref<1x16x64xf32, #tpu.memory_space<vmem>>, vector<1x16x64xf32>
    %30 = vector.shape_cast %29 : vector<1x16x64xf32> to vector<16x64xf32>
    %31 = vector.shape_cast %28 : vector<16x64xf32> to vector<1x16x64xf32>
    tpu.vector_store %arg9[%c0_17, %c0_18, %c0_19], %31 {strides = array<i32>} : memref<1x16x64xf32, #tpu.memory_space<vmem>>, vector<1x16x64xf32>,
    return
  }
  func.func @transform_0(%arg0: i32, %arg1: i32) -> (i32, i32, i32) {
    %c0_i32 = arith.constant 0 : i32
    %c0_i32_0 = arith.constant 0 : i32
    return %arg0, %c0_i32, %arg1 : i32, i32, i32
  }
  func.func @transform_1(%arg0: i32, %arg1: i32) -> (i32, i32, i32) {
    %c0_i32 = arith.constant 0 : i32
    %c0_i32_0 = arith.constant 0 : i32
    %c0_i32_1 = arith.constant 0 : i32
    return %arg0, %c0_i32, %c0_i32_0 : i32, i32, i32
  }
  func.func @transform_2(%arg0: i32, %arg1: i32) -> (i32, i32) {
    %c0_i32 = arith.constant 0 : i32
    %c0_i32_0 = arith.constant 0 : i32
    %c0_i32_1 = arith.constant 0 : i32
    return %c0_i32, %c0_i32_0 : i32, i32
  }
  func.func @transform_3(%arg0: i32, %arg1: i32) -> (i32, i32) {
    %c0_i32 = arith.constant 0 : i32
    %c0_i32_0 = arith.constant 0 : i32
    %c0_i32_1 = arith.constant 0 : i32
    return %c0_i32, %c0_i32_0 : i32, i32
  }
  func.func @transform_4(%arg0: i32, %arg1: i32) -> (i32, i32) {
    %c0_i32 = arith.constant 0 : i32
    %c0_i32_0 = arith.constant 0 : i32
    %c0_i32_1 = arith.constant 0 : i32
    return %c0_i32, %c0_i32_0 : i32, i32
  }
  func.func @transform_5(%arg0: i32, %arg1: i32) -> (i32, i32) {
    %c0_i32 = arith.constant 0 : i32
    %c0_i32_0 = arith.constant 0 : i32
    %c0_i32_1 = arith.constant 0 : i32
    return %c0_i32, %c0_i32_0 : i32, i32
  }
  func.func @transform_6(%arg0: i32, %arg1: i32) -> (i32, i32) {
    %c0_i32 = arith.constant 0 : i32
    %c0_i32_0 = arith.constant 0 : i32
    %c0_i32_1 = arith.constant 0 : i32
    return %c0_i32, %c0_i32_0 : i32, i32
  }
  func.func @transform_7(%arg0: i32, %arg1: i32) -> (i32, i32, i32) {
    %c0_i32 = arith.constant 0 : i32
    %c0_i32_0 = arith.constant 0 : i32
    return %arg0, %c0_i32, %arg1 : i32, i32, i32
  }
  func.func @transform_8(%arg0: i32, %arg1: i32) -> (i32, i32, i32) {
    %c0_i32 = arith.constant 0 : i32
    %c0_i32_0 = arith.constant 0 : i32
    return %arg0, %arg1, %c0_i32 : i32, i32, i32
  }
}

</mosaic_0001>

<llo_original>
// kernel: tpu_custom_call.1
$region0: #{tpu_custom_call.1}
  #allocation0 [shape = 'u32[]', space=smem, size = 0x4, offset = 0x4, fixed_abs, tag = 'smem constant byte address 0x4 - core index']
  #allocation1 [shape = 'u32[144,128]{1,0:T(1,128)}', space=vmem, size = 0x12000, scoped, tag = 'internal scratch']
  #allocation2 [shape = 'f32[16,64]{1,0:T(8,128)}', space=vmem, size = 0x2000, scoped, tag = 'scratch operand']
  #allocation3 [shape = 'f32[1,64]{1,0:T(1,128)}', space=vmem, size = 0x200, scoped, tag = 'scratch operand']
  #allocation4 [shape = 'f32[16,64]{1,0:T(8,128)}', space=vmem, size = 0x2000, scoped, tag = 'scratch operand']
  #allocation5 [shape = 'f32[1,1]{1,0:T(1,128)S(6)}', space=smem, size = 0x200, scoped, tag = 'scoped memory for tpu_custom_call.1']
  %s0 = inlined_call_operand.hbm [shape: f32[2,16,64], index: 0, kind: input, shape index: {}]
  %s1 = inlined_call_operand.hbm [shape: f32[2,16,64], index: 1, kind: input, shape index: {}]
  %s2 = inlined_call_operand.vmem [shape: f32[16,16], index: 2, kind: input, shape index: {}]
  %s3 = inlined_call_operand.hbm [shape: f32[1,16], index: 3, kind: input, shape index: {}]
  %s4 = inlined_call_operand.vmem [shape: f32[16,16], index: 4, kind: input, shape index: {}]
  %s5 = inlined_call_operand.vmem [shape: f32[16,1], index: 5, kind: input, shape index: {}]
  %s6 = inlined_call_operand.<no memory space> [shape: f32[1,1], index: 6, kind: input, shape index: {}]
  %s7 = inlined_call_operand.hbm [shape: f32[2,16,64], index: 7, kind: output, shape index: {0}]
  %s8 = inlined_call_operand.hbm [shape: f32[2,64,64], index: 8, kind: output, shape index: {1}]
  %9 = xla_tuple %s7, %s8
  %s10 = sld [smem:[#allocation0]]
  $region85: #{tpu_custom_call.1} parent=0
    _
  %s12 = ssub.s32 1, %s10
  %s13 = scalar_select 0, %s12, %s10
  %14 = sst [smem:[#allocation5]] %s6
  $region1: #{tpu_custom_call.1} parent=0
    #allocation6 [shape = 'u8[16384]{0}', space=vmem, size = 0x4000, scoped, tag = 'input window, operand 0']
    #allocation7 [shape = 's32[2]{0}', space=sflag, size = 0x8, scoped, tag = 'scoped memory for tpu_custom_call.1']
    #allocation8 [shape = 's32[2]{0}', space=sflag, size = 0x8, scoped, tag = 'scoped memory for tpu_custom_call.1']
    #allocation9 [shape = 'u8[16384]{0}', space=vmem, size = 0x4000, scoped, tag = 'input window, operand 1']
    #allocation10 [shape = 's32[2]{0}', space=sflag, size = 0x8, scoped, tag = 'scoped memory for tpu_custom_call.1']
    #allocation11 [shape = 'u8[512]{0}', space=vmem, size = 0x400, scoped, tag = 'input window, operand 3, single buffered']
    #allocation12 [shape = 'u8[16384]{0}', space=vmem, size = 0x4000, scoped, tag = 'output window, operand 0']
    #allocation13 [shape = 'u8[65536]{0}', space=vmem, size = 0x10000, scoped, tag = 'output window, operand 1']
    #allocation14 [shape = 's32[2]{0}', space=sflag, size = 0x8, scoped, tag = 'scoped memory for tpu_custom_call.1']
    %15 = vsyncpa [#allocation7], 0
    %s16 = scalar_lea.sflag [#allocation7], 1
    %17 = vsyncpa %s16, 0
    %18 = vsyncpa [#allocation10], 0
    %s19 = scalar_lea.sflag [#allocation10], 1
    %20 = vsyncpa %s19, 0
    %21 = vsyncpa [#allocation8], 0
    %s22 = scalar_lea.sflag [#allocation8], 1
    %23 = vsyncpa %s22, 0
    %24 = vsyncpa [#allocation14], 0
    %s25 = scalar_lea.sflag [#allocation14], 1
    %26 = vsyncpa %s25, 0
    loop: start=0, step=1, limit=4
    $region2: #{tpu_custom_call.1} parent=1 // loop_pre_header
      _
    $region3: #{tpu_custom_call.1} parent=1 // loop_header
      %s28 = sphi 0, %s32
      %p29 = scmp.ge.s32.totalorder %s28, 4
      %s35 = sphi 0, %s47
      %s36 = sphi 0, %s43
      %s37 = sphi 0, %s35
      %s38 = sphi 0, %s36
      %s39 = sphi 0, %s37
      %s40 = sphi 0, %s38
      %s52 = sphi 0, %s54
      %s55 = sphi 0, %s52
      %s56 = sphi 0, %s55
      %s72 = sphi 0, %s56
      %s78 = sphi 0, %s80
      %s81 = sphi 0, %s78
      %s82 = sphi 0, %s81
      %s98 = sphi 0, %s82
      %s102 = sphi 0, %s102
      %s104 = sphi 0, %s102
      %s105 = sphi 0, %s104
      %s119 = sphi 0, %s105
      %s123 = sphi 0, %s123
      %s125 = sphi 0, %s123
      %s126 = sphi 0, %s125
      %s140 = sphi 0, %s126
      %s144 = sphi 0, %s144
      %s146 = sphi 0, %s144
      %s147 = sphi 0, %s146
      %s161 = sphi 0, %s147
      %s165 = sphi 0, %s165
      %s167 = sphi 0, %s165
      %s168 = sphi 0, %s167
      %s182 = sphi 0, %s168
      %s186 = sphi 0, %s186
      %s188 = sphi 0, %s186
      %s189 = sphi 0, %s188
      %s203 = sphi 0, %s189
      %s211 = sphi 0, %s213
      %s214 = sphi 0, %s211
      %s215 = sphi 0, %s214
      %s231 = sphi 0, %s215
      %s239 = sphi 0, %s241
      %s242 = sphi 0, %s239
      %s243 = sphi 0, %s242
      %s259 = sphi 0, %s243
    $region4: #{tpu_custom_call.1} parent=1 // loop_header_branch
      %31 = sbr.rel (%p29) target = $region8
    $region5: #{tpu_custom_call.1} parent=1 // loop_body
      %s33 = ssub.s32 %s28, 1
      %s34 = ssub.s32 %s28, 2
      %s41 = sadd.s32 1, %s36
      %p42 = scmp.ge.s32.totalorder %s41, 1
      %s43 = scalar_select %p42, 0, %s41
      %s44 = sadd.s32 1, %s35
      %s45 = scalar_select %p42, %s44, %s35
      %p46 = scmp.ge.s32.totalorder %s45, 2
      %s47 = scalar_select %p46, 0, %s45
      %s48 = ssub.s32 %s35, %s47
      %s49 = ssub.s32 %s36, %s43
      %s50 = sor.u32 %s48, %s49
      %p51 = scmp.eq.s32.totalorder %s50, 0
      %s53 = sadd.s32 %s52, 1
      %s54 = scalar_select %p51, %s52, %s53
      %p57 = pneg %p51
      %p58 = scmp.eq.s32.totalorder %s28, 1
      %p59 = por %p57, %p58
      %p60 = scmp.ne.s32.totalorder %s52, %s55
      %p61 = scmp.eq.s32.totalorder %s28, 0
      %p62 = por %p60, %p61
      %p63 = scmp.ne.s32.totalorder %s52, %s55
      %p64 = scmp.eq.s32.totalorder %s33, 1
      %p65 = por %p63, %p64
      %p66 = scmp.ne.s32.totalorder %s55, %s56
      %p67 = scmp.eq.s32.totalorder %s33, 0
      %p68 = por %p66, %p67
      %p69 = scmp.ne.s32.totalorder %s55, %s56
      %p70 = scmp.eq.s32.totalorder %s34, 1
      %p71 = por %p69, %p70
      %p73 = scmp.ne.s32.totalorder %s56, %s72
      %p74 = scmp.eq.s32.totalorder %s34, 0
      %p75 = por %p73, %p74
      %s76 = ssub.s32 %s35, %s47
      %p77 = scmp.eq.s32.totalorder %s76, 0
      %s79 = sadd.s32 %s78, 1
      %s80 = scalar_select %p77, %s78, %s79
      %p83 = pneg %p77
      %p84 = scmp.eq.s32.totalorder %s28, 1
      %p85 = por %p83, %p84
      %p86 = scmp.ne.s32.totalorder %s78, %s81
      %p87 = scmp.eq.s32.totalorder %s28, 0
      %p88 = por %p86, %p87
      %p89 = scmp.ne.s32.totalorder %s78, %s81
      %p90 = scmp.eq.s32.totalorder %s33, 1
      %p91 = por %p89, %p90
      %p92 = scmp.ne.s32.totalorder %s81, %s82
      %p93 = scmp.eq.s32.totalorder %s33, 0
      %p94 = por %p92, %p93
      %p95 = scmp.ne.s32.totalorder %s81, %s82
      %p96 = scmp.eq.s32.totalorder %s34, 1
      %p97 = por %p95, %p96
      %p99 = scmp.ne.s32.totalorder %s82, %s98
      %p100 = scmp.eq.s32.totalorder %s34, 0
      %p101 = por %p99, %p100
      %s103 = sadd.s32 %s102, 1
      %p106 = scmp.eq.s32.totalorder %s28, 1
      %p107 = scmp.ne.s32.totalorder %s102, %s104
      %p108 = scmp.eq.s32.totalorder %s28, 0
      %p109 = por %p107, %p108
      %p110 = scmp.ne.s32.totalorder %s102, %s104
      %p111 = scmp.eq.s32.totalorder %s33, 1
      %p112 = por %p110, %p111
      %p113 = scmp.ne.s32.totalorder %s104, %s105
      %p114 = scmp.eq.s32.totalorder %s33, 0
      %p115 = por %p113, %p114
      %p116 = scmp.ne.s32.totalorder %s104, %s105
      %p117 = scmp.eq.s32.totalorder %s34, 1
      %p118 = por %p116, %p117
      %p120 = scmp.ne.s32.totalorder %s105, %s119
      %p121 = scmp.eq.s32.totalorder %s34, 0
      %p122 = por %p120, %p121
      %s124 = sadd.s32 %s123, 1
      %p127 = scmp.eq.s32.totalorder %s28, 1
      %p128 = scmp.ne.s32.totalorder %s123, %s125
      %p129 = scmp.eq.s32.totalorder %s28, 0
      %p130 = por %p128, %p129
      %p131 = scmp.ne.s32.totalorder %s123, %s125
      %p132 = scmp.eq.s32.totalorder %s33, 1
      %p133 = por %p131, %p132
      %p134 = scmp.ne.s32.totalorder %s125, %s126
      %p135 = scmp.eq.s32.totalorder %s33, 0
      %p136 = por %p134, %p135
      %p137 = scmp.ne.s32.totalorder %s125, %s126
      %p138 = scmp.eq.s32.totalorder %s34, 1
      %p139 = por %p137, %p138
      %p141 = scmp.ne.s32.totalorder %s126, %s140
      %p142 = scmp.eq.s32.totalorder %s34, 0
      %p143 = por %p141, %p142
      %s145 = sadd.s32 %s144, 1
      %p148 = scmp.eq.s32.totalorder %s28, 1
      %p149 = scmp.ne.s32.totalorder %s144, %s146
      %p150 = scmp.eq.s32.totalorder %s28, 0
      %p151 = por %p149, %p150
      %p152 = scmp.ne.s32.totalorder %s144, %s146
      %p153 = scmp.eq.s32.totalorder %s33, 1
      %p154 = por %p152, %p153
      %p155 = scmp.ne.s32.totalorder %s146, %s147
      %p156 = scmp.eq.s32.totalorder %s33, 0
      %p157 = por %p155, %p156
      %p158 = scmp.ne.s32.totalorder %s146, %s147
      %p159 = scmp.eq.s32.totalorder %s34, 1
      %p160 = por %p158, %p159
      %p162 = scmp.ne.s32.totalorder %s147, %s161
      %p163 = scmp.eq.s32.totalorder %s34, 0
      %p164 = por %p162, %p163
      %s166 = sadd.s32 %s165, 1
      %p169 = scmp.eq.s32.totalorder %s28, 1
      %p170 = scmp.ne.s32.totalorder %s165, %s167
      %p171 = scmp.eq.s32.totalorder %s28, 0
      %p172 = por %p170, %p171
      %p173 = scmp.ne.s32.totalorder %s165, %s167
      %p174 = scmp.eq.s32.totalorder %s33, 1
      %p175 = por %p173, %p174
      %p176 = scmp.ne.s32.totalorder %s167, %s168
      %p177 = scmp.eq.s32.totalorder %s33, 0
      %p178 = por %p176, %p177
      %p179 = scmp.ne.s32.totalorder %s167, %s168
      %p180 = scmp.eq.s32.totalorder %s34, 1
      %p181 = por %p179, %p180
      %p183 = scmp.ne.s32.totalorder %s168, %s182
      %p184 = scmp.eq.s32.totalorder %s34, 0
      %p185 = por %p183, %p184
      %s187 = sadd.s32 %s186, 1
      %p190 = scmp.eq.s32.totalorder %s28, 1
      %p191 = scmp.ne.s32.totalorder %s186, %s188
      %p192 = scmp.eq.s32.totalorder %s28, 0
      %p193 = por %p191, %p192
      %p194 = scmp.ne.s32.totalorder %s186, %s188
      %p195 = scmp.eq.s32.totalorder %s33, 1
      %p196 = por %p194, %p195
      %p197 = scmp.ne.s32.totalorder %s188, %s189
      %p198 = scmp.eq.s32.totalorder %s33, 0
      %p199 = por %p197, %p198
      %p200 = scmp.ne.s32.totalorder %s188, %s189
      %p201 = scmp.eq.s32.totalorder %s34, 1
      %p202 = por %p200, %p201
      %p204 = scmp.ne.s32.totalorder %s189, %s203
      %p205 = scmp.eq.s32.totalorder %s34, 0
      %p206 = por %p204, %p205
      %s207 = ssub.s32 %s35, %s47
      %s208 = ssub.s32 %s36, %s43
      %s209 = sor.u32 %s207, %s208
      %p210 = scmp.eq.s32.totalorder %s209, 0
      %s212 = sadd.s32 %s211, 1
      %s213 = scalar_select %p210, %s211, %s212
      %p216 = pneg %p210
      %p217 = scmp.eq.s32.totalorder %s28, 1
      %p218 = por %p216, %p217
      %p219 = scmp.ne.s32.totalorder %s211, %s214
      %p220 = scmp.eq.s32.totalorder %s28, 0
      %p221 = por %p219, %p220
      %p222 = scmp.ne.s32.totalorder %s211, %s214
      %p223 = scmp.eq.s32.totalorder %s33, 1
      %p224 = por %p222, %p223
      %p225 = scmp.ne.s32.totalorder %s214, %s215
      %p226 = scmp.eq.s32.totalorder %s33, 0
      %p227 = por %p225, %p226
      %p228 = scmp.ne.s32.totalorder %s214, %s215
      %p229 = scmp.eq.s32.totalorder %s34, 1
      %p230 = por %p228, %p229
      %p232 = scmp.ne.s32.totalorder %s215, %s231
      %p233 = scmp.eq.s32.totalorder %s34, 0
      %p234 = por %p232, %p233
      %s235 = ssub.s32 %s35, %s47
      %s236 = ssub.s32 %s36, %s43
      %s237 = sor.u32 %s235, %s236
      %p238 = scmp.eq.s32.totalorder %s237, 0
      %s240 = sadd.s32 %s239, 1
      %s241 = scalar_select %p238, %s239, %s240
      %p244 = pneg %p238
      %p245 = scmp.eq.s32.totalorder %s28, 1
      %p246 = por %p244, %p245
      %p247 = scmp.ne.s32.totalorder %s239, %s242
      %p248 = scmp.eq.s32.totalorder %s28, 0
      %p249 = por %p247, %p248
      %p250 = scmp.ne.s32.totalorder %s239, %s242
      %p251 = scmp.eq.s32.totalorder %s33, 1
      %p252 = por %p250, %p251
      %p253 = scmp.ne.s32.totalorder %s242, %s243
      %p254 = scmp.eq.s32.totalorder %s33, 0
      %p255 = por %p253, %p254
      %p256 = scmp.ne.s32.totalorder %s242, %s243
      %p257 = scmp.eq.s32.totalorder %s34, 1
      %p258 = por %p256, %p257
      %p260 = scmp.ne.s32.totalorder %s243, %s259
      %p261 = scmp.eq.s32.totalorder %s34, 0
      %p262 = por %p260, %p261
      %p263 = scmp.le.s32.totalorder 1, %s28
      %p264 = scmp.lt.s32.totalorder %s28, 3
      %p265 = pnand %p263, %p264
      %p266 = pneg %p265
      // Predicated region
      $region9: #{tpu_custom_call.1} parent=5 // pred_check
        _
      $region10: #{tpu_custom_call.1} parent=5 // pred_check_branch
        %268 = sbr.rel (%p265) target = $region12
      $region11: #{tpu_custom_call.1} parent=5 // pred_region
        %s269 = ssub.s32 %s28, 1
        // Predicated region
        $region13: #{tpu_custom_call.1} parent=11 // pred_check
          %p270 = pneg %p115
        $region14: #{tpu_custom_call.1} parent=11 // pred_check_branch
          %272 = sbr.rel (%p270) target = $region16
        $region15: #{tpu_custom_call.1} parent=11 // pred_region
          _
        $region16: #{tpu_custom_call.1} parent=11 // pred_fallthru
          _
        // Predicated region
        $region17: #{tpu_custom_call.1} parent=11 // pred_check
          %p273 = pneg %p136
        $region18: #{tpu_custom_call.1} parent=11 // pred_check_branch
          %275 = sbr.rel (%p273) target = $region20
        $region19: #{tpu_custom_call.1} parent=11 // pred_region
          %s277 = ssub.s32 16, 16
          %278 = vsyncadd [#allocation10], %s277
          %s280 = sshll.u32 [#allocation11], 4
          %s281 = int_to_ptr.vmem [resolvable:$true] %s280
          %283 = dma.hbm_to_vmem [thread:$0]  %s3, 16, %s281, [#allocation10]
        $region20: #{tpu_custom_call.1} parent=11 // pred_fallthru
          _
        // Predicated region
        $region21: #{tpu_custom_call.1} parent=11 // pred_check
          %p284 = pneg %p157
        $region22: #{tpu_custom_call.1} parent=11 // pred_check_branch
          %286 = sbr.rel (%p284) target = $region24
        $region23: #{tpu_custom_call.1} parent=11 // pred_region
          _
        $region24: #{tpu_custom_call.1} parent=11 // pred_fallthru
          _
        // Predicated region
        $region25: #{tpu_custom_call.1} parent=11 // pred_check
          %p287 = pneg %p178
        $region26: #{tpu_custom_call.1} parent=11 // pred_check_branch
          %289 = sbr.rel (%p287) target = $region28
        $region27: #{tpu_custom_call.1} parent=11 // pred_region
          _
        $region28: #{tpu_custom_call.1} parent=11 // pred_fallthru
          _
        // Predicated region
        $region29: #{tpu_custom_call.1} parent=11 // pred_check
          %p290 = pneg %p199
        $region30: #{tpu_custom_call.1} parent=11 // pred_check_branch
          %292 = sbr.rel (%p290) target = $region32
        $region31: #{tpu_custom_call.1} parent=11 // pred_region
          _
        $region32: #{tpu_custom_call.1} parent=11 // pred_fallthru
          _
      $region12: #{tpu_custom_call.1} parent=5 // pred_fallthru
        _
      %p293 = scmp.lt.s32.totalorder %s28, 2
      // Predicated region
      $region33: #{tpu_custom_call.1} parent=5 // pred_check
        %p294 = pneg %p293
      $region34: #{tpu_custom_call.1} parent=5 // pred_check_branch
        %296 = sbr.rel (%p294) target = $region36
      $region35: #{tpu_custom_call.1} parent=5 // pred_region
        // Predicated region
        $region37: #{tpu_custom_call.1} parent=35 // pred_check
          %p297 = pneg %p62
        $region38: #{tpu_custom_call.1} parent=35 // pred_check_branch
          %299 = sbr.rel (%p297) target = $region40
        $region39: #{tpu_custom_call.1} parent=35 // pred_region
          %s300 = sand.u32 %s52, 1
          %s301 = scalar_lea.sflag [#allocation7], %s300
          %s302 = sand.u32 %s52, 1
          %s303 = smul.addr %s302, 16
          %s304 = scalar_lea.vmem [#allocation6], %s303
          %s306 = ssub.s32 256, 256
          %307 = vsyncadd %s301, %s306
          %s308 = smul.addr %s35, 2
          %s309 = sadd.s32 %s36, %s308
          %s310 = smul.addr %s309, 128
          %s311 = scalar_lea.hbm %s0, %s310
          %s312 = sshll.u32 %s304, 4
          %s313 = int_to_ptr.vmem [resolvable:$true] %s312
          %318 = dma.hbm_to_vmem [thread:$0]  %s311, 256, %s313, %s301, 128, 128, 8
        $region40: #{tpu_custom_call.1} parent=35 // pred_fallthru
          _
        // Predicated region
        $region41: #{tpu_custom_call.1} parent=35 // pred_check
          %p319 = pneg %p88
        $region42: #{tpu_custom_call.1} parent=35 // pred_check_branch
          %321 = sbr.rel (%p319) target = $region44
        $region43: #{tpu_custom_call.1} parent=35 // pred_region
          %s322 = sand.u32 %s28, 1
          %s323 = scalar_lea.sflag [#allocation10], %s322
          %s324 = sand.u32 %s78, 1
          %s325 = smul.addr %s324, 16
          %s326 = scalar_lea.vmem [#allocation9], %s325
          %s328 = ssub.s32 256, 256
          %329 = vsyncadd %s323, %s328
          %s330 = smul.addr %s35, 2
          %s331 = smul.addr %s330, 128
          %s332 = scalar_lea.hbm %s1, %s331
          %s333 = sshll.u32 %s326, 4
          %s334 = int_to_ptr.vmem [resolvable:$true] %s333
          %339 = dma.hbm_to_vmem [thread:$0]  %s332, 256, %s334, %s323, 128, 128, 8
        $region44: #{tpu_custom_call.1} parent=35 // pred_fallthru
          _
      $region36: #{tpu_custom_call.1} parent=5 // pred_fallthru
        _
      %p340 = scmp.le.s32.totalorder 1, %s28
      %p341 = scmp.lt.s32.totalorder %s28, 3
      %p342 = pnand %p340, %p341
      %p343 = pneg %p342
      // Predicated region
      $region45: #{tpu_custom_call.1} parent=5 // pred_check
        _
      $region46: #{tpu_custom_call.1} parent=5 // pred_check_branch
        %345 = sbr.rel (%p342) target = $region48
      $region47: #{tpu_custom_call.1} parent=5 // pred_region
        %s346 = ssub.s32 %s28, 1
        %s347 = sand.u32 %s55, 1
        %s348 = scalar_lea.sflag [#allocation7], %s347
        %s349 = sand.u32 %s55, 1
        %s350 = smul.addr %s349, 16
        %s351 = scalar_lea.vmem [#allocation6], %s350
        // Predicated region
        $region49: #{tpu_custom_call.1} parent=47 // pred_check
          %p352 = pneg %p68
        $region50: #{tpu_custom_call.1} parent=47 // pred_check_branch
          %354 = sbr.rel (%p352) target = $region52
        $region51: #{tpu_custom_call.1} parent=47 // pred_region
          %355 = dma.done %s348, 256
        $region52: #{tpu_custom_call.1} parent=47 // pred_fallthru
          _
        %s356 = sand.u32 %s33, 1
        %s357 = scalar_lea.sflag [#allocation10], %s356
        %s358 = sand.u32 %s81, 1
        %s359 = smul.addr %s358, 16
        %s360 = scalar_lea.vmem [#allocation9], %s359
        // Predicated region
        $region53: #{tpu_custom_call.1} parent=47 // pred_check
          %p361 = pneg %p94
        $region54: #{tpu_custom_call.1} parent=47 // pred_check_branch
          %363 = sbr.rel (%p361) target = $region56
        $region55: #{tpu_custom_call.1} parent=47 // pred_region
          %364 = dma.done %s357, 256
        $region56: #{tpu_custom_call.1} parent=47 // pred_fallthru
          _
        // Predicated region
        $region57: #{tpu_custom_call.1} parent=47 // pred_check
          %p365 = pneg %p136
        $region58: #{tpu_custom_call.1} parent=47 // pred_check_branch
          %367 = sbr.rel (%p365) target = $region60
        $region59: #{tpu_custom_call.1} parent=47 // pred_region
          %368 = dma.done [#allocation10], 16
        $region60: #{tpu_custom_call.1} parent=47 // pred_fallthru
          _
        %s369 = sand.u32 %s55, 1
        %s370 = scalar_lea.sflag [#allocation7], %s369
        %s371 = sand.u32 %s55, 1
        %s372 = smul.addr %s371, 16
        %s373 = scalar_lea.vmem [#allocation6], %s372
        %p374 = pneg %p68
        %p375 = pneg %p65
        %s376 = sand.u32 %s33, 1
        %s377 = scalar_lea.sflag [#allocation10], %s376
        %s378 = sand.u32 %s81, 1
        %s379 = smul.addr %s378, 16
        %s380 = scalar_lea.vmem [#allocation9], %s379
        %p381 = pneg %p94
        %p382 = pneg %p91
        %p383 = pneg %p115
        %p384 = pneg %p112
        %p385 = pneg %p136
        %p386 = pneg %p133
        %p387 = pneg %p157
        %p388 = pneg %p154
        %p389 = pneg %p178
        %p390 = pneg %p175
        %p391 = pneg %p199
        %p392 = pneg %p196
        %p393 = pneg %p227
        %p394 = pneg %p224
        %s395 = sand.u32 %s214, 1
        %s396 = scalar_lea.sflag [#allocation8], %s395
        %s397 = sand.u32 %s214, 1
        %s398 = smul.addr %s397, 16
        %s399 = scalar_lea.vmem [#allocation12], %s398
        %p400 = pneg %p255
        %p401 = pneg %p252
        %s402 = sand.u32 %s242, 1
        %s403 = scalar_lea.sflag [#allocation14], %s402
        %s404 = sand.u32 %s242, 1
        %s405 = smul.addr %s404, 64
        %s406 = scalar_lea.vmem [#allocation13], %s405
        %s407 = smul.u32 8, %s38
        %p408 = scmp.eq.s32.totalorder %s38, 0
        // Predicated region
        $region61: #{tpu_custom_call.1} parent=47 // pred_check
          %p409 = pneg %p408
        $region62: #{tpu_custom_call.1} parent=47 // pred_check_branch
          %411 = sbr.rel (%p409) target = $region64
        $region63: #{tpu_custom_call.1} parent=47 // pred_region
          %v412 = vld [vmem:[%s360] sm:$0xff]
          %v413 = vld [vmem:[%s360 + $0x8] sm:$0xff]
          %v414 = vld [vmem:[%s2] sm:$0xff]
          %v415 = vld [vmem:[%s2 + $0x8] sm:$0xff]
          %vm416 = vcmask 130048
          %v418 = vsel %vm416, %v414, 0
          %v421 = vsel %vm416, %v415, 0
          %423 = vmatprep.subr.mxu0 0.0
          %424 = vmatpush1.msra.mxu0 %v412
          %425 = vmatprep.subr.mxu0 0.0
          %426 = vmatpush1.msra.mxu0 %v413
          %427 = vmatprep.subr.mxu0 0.0
          %428 = vmatpush1.msra.mxu0 0.0
          %429 = vmatprep.subr.mxu0 0.0
          %430 = vmatpush1.msra.mxu0 0.0
          %431 = vmatprep.subr.mxu0 0.0
          %432 = vmatpush1.msra.mxu0 0.0
          %433 = vmatprep.subr.mxu0 0.0
          %434 = vmatpush1.msra.mxu0 0.0
          %435 = vmatprep.subr.mxu0 0.0
          %436 = vmatpush1.msra.mxu0 0.0
          %437 = vmatprep.subr.mxu0 0.0
          %438 = vmatpush1.msra.mxu0 0.0
          %439 = vmatprep.subr.mxu0 0.0
          %440 = vmatpush1.msra.mxu0 0.0
          %441 = vmatprep.subr.mxu0 0.0
          %442 = vmatpush1.msra.mxu0 0.0
          %443 = vmatprep.subr.mxu0 0.0
          %444 = vmatpush1.msra.mxu0 0.0
          %445 = vmatprep.subr.mxu0 0.0
          %446 = vmatpush1.msra.mxu0 0.0
          %447 = vmatprep.subr.mxu0 0.0
          %448 = vmatpush1.msra.mxu0 0.0
          %449 = vmatprep.subr.mxu0 0.0
          %450 = vmatpush1.msra.mxu0 0.0
          %451 = vmatprep.subr.mxu0 0.0
          %452 = vmatpush1.msra.mxu0 0.0
          %453 = vmatprep.subr.mxu0 0.0
          %454 = vmatpush1.msra.mxu0 0.0
          %455 = vmatprep.subr.mxu0 0.0
          %456 = vmatpush1.msra.mxu0 0.0
          %457 = vmatprep.subr.mxu0 0.0
          %458 = vmatpush1.msra.mxu0 0.0
          %459 = vmatprep.subr.mxu0 0.0
          %460 = vmatpush1.msra.mxu0 0.0
          %461 = vmatprep.subr.mxu0 0.0
          %462 = vmatpush1.msra.mxu0 0.0
          %463 = vmatprep.subr.mxu0 0.0
          %464 = vmatpush1.msra.mxu0 0.0
          %465 = vmatprep.subr.mxu0 0.0
          %466 = vmatpush1.msra.mxu0 0.0
          %467 = vmatprep.subr.mxu0 0.0
          %468 = vmatpush1.msra.mxu0 0.0
          %469 = vmatprep.subr.mxu0 0.0
          %470 = vmatpush1.msra.mxu0 0.0
          %471 = vmatprep.subr.mxu0 0.0
          %472 = vmatpush1.msra.mxu0 0.0
          %473 = vmatprep.subr.mxu0 0.0
          %474 = vmatpush1.msra.mxu0 0.0
          %475 = vmatprep.subr.mxu0 0.0
          %476 = vmatpush1.msra.mxu0 0.0
          %477 = vmatprep.subr.mxu0 0.0
          %478 = vmatpush1.msra.mxu0 0.0
          %479 = vmatprep.subr.mxu0 0.0
          %480 = vmatpush1.msra.mxu0 0.0
          %481 = vmatprep.subr.mxu0 0.0
          %482 = vmatpush1.msra.mxu0 0.0
          %483 = vmatprep.subr.mxu0 0.0
          %484 = vmatpush1.msra.mxu0 0.0
          %485 = vmatprep.subr.mxu0 0.0
          %486 = vmatpush1.msra.mxu0 0.0
          %487 = vmatprep.mubr.f32.mxu0 0.0
          %488 = vmatmul.mubr.f32.gmra.mrb[0].mxu0 %v418
          %v489 = vpop.f32.mrb[0].mxu0
          %v490 = vadd.f32 0.0, %v489
          %v491 = vpop.f32.mrb[0].mxu0
          %492 = vmatprep.mubr.f32.mxu0 0.0
          %493 = vmatmul.mubr.f32.gmra.mrb[0].mxu0 %v421
          %v494 = vpop.f32.mrb[0].mxu0
          %v495 = vadd.f32 0.0, %v494
          %v496 = vpop.f32.mrb[0].mxu0
          %497 = vdwg.mxu0
          %vm498 = vcmask 523264
          %499 = vst.msk [vmem:[#allocation2] sm:$0xff] %vm498, %v490
          %500 = vst.msk [vmem:[#allocation2 + $0x8] sm:$0xff] %vm498, %v495
          %v501 = vld [vmem:[#allocation11] sm:$0x1]
          %v503 = vsel %vm416, %v501, 0
          %505 = vmatprep.subr.mxu0 0.0
          %506 = vmatpush1.msra.mxu0 %v412
          %507 = vmatprep.subr.mxu0 0.0
          %508 = vmatpush1.msra.mxu0 %v413
          %509 = vmatprep.subr.mxu0 0.0
          %510 = vmatpush1.msra.mxu0 0.0
          %511 = vmatprep.subr.mxu0 0.0
          %512 = vmatpush1.msra.mxu0 0.0
          %513 = vmatprep.subr.mxu0 0.0
          %514 = vmatpush1.msra.mxu0 0.0
          %515 = vmatprep.subr.mxu0 0.0
          %516 = vmatpush1.msra.mxu0 0.0
          %517 = vmatprep.subr.mxu0 0.0
          %518 = vmatpush1.msra.mxu0 0.0
          %519 = vmatprep.subr.mxu0 0.0
          %520 = vmatpush1.msra.mxu0 0.0
          %521 = vmatprep.subr.mxu0 0.0
          %522 = vmatpush1.msra.mxu0 0.0
          %523 = vmatprep.subr.mxu0 0.0
          %524 = vmatpush1.msra.mxu0 0.0
          %525 = vmatprep.subr.mxu0 0.0
          %526 = vmatpush1.msra.mxu0 0.0
          %527 = vmatprep.subr.mxu0 0.0
          %528 = vmatpush1.msra.mxu0 0.0
          %529 = vmatprep.subr.mxu0 0.0
          %530 = vmatpush1.msra.mxu0 0.0
          %531 = vmatprep.subr.mxu0 0.0
          %532 = vmatpush1.msra.mxu0 0.0
          %533 = vmatprep.subr.mxu0 0.0
          %534 = vmatpush1.msra.mxu0 0.0
          %535 = vmatprep.subr.mxu0 0.0
          %536 = vmatpush1.msra.mxu0 0.0
          %537 = vmatprep.subr.mxu0 0.0
          %538 = vmatpush1.msra.mxu0 0.0
          %539 = vmatprep.subr.mxu0 0.0
          %540 = vmatpush1.msra.mxu0 0.0
          %541 = vmatprep.subr.mxu0 0.0
          %542 = vmatpush1.msra.mxu0 0.0
          %543 = vmatprep.subr.mxu0 0.0
          %544 = vmatpush1.msra.mxu0 0.0
          %545 = vmatprep.subr.mxu0 0.0
          %546 = vmatpush1.msra.mxu0 0.0
          %547 = vmatprep.subr.mxu0 0.0
          %548 = vmatpush1.msra.mxu0 0.0
          %549 = vmatprep.subr.mxu0 0.0
          %550 = vmatpush1.msra.mxu0 0.0
          %551 = vmatprep.subr.mxu0 0.0
          %552 = vmatpush1.msra.mxu0 0.0
          %553 = vmatprep.subr.mxu0 0.0
          %554 = vmatpush1.msra.mxu0 0.0
          %555 = vmatprep.subr.mxu0 0.0
          %556 = vmatpush1.msra.mxu0 0.0
          %557 = vmatprep.subr.mxu0 0.0
          %558 = vmatpush1.msra.mxu0 0.0
          %559 = vmatprep.subr.mxu0 0.0
          %560 = vmatpush1.msra.mxu0 0.0
          %561 = vmatprep.subr.mxu0 0.0
          %562 = vmatpush1.msra.mxu0 0.0
          %563 = vmatprep.subr.mxu0 0.0
          %564 = vmatpush1.msra.mxu0 0.0
          %565 = vmatprep.subr.mxu0 0.0
          %566 = vmatpush1.msra.mxu0 0.0
          %567 = vmatprep.subr.mxu0 0.0
          %568 = vmatpush1.msra.mxu0 0.0
          %569 = vmatprep.mubr.f32.mxu0 0.0
          %570 = vmatmul.mubr.f32.gmra.mrb[0].mxu0 %v503
          %v571 = vpop.f32.mrb[0].mxu0
          %v572 = vadd.f32 0.0, %v571
          %v573 = vpop.f32.mrb[0].mxu0
          %574 = vdwg.mxu0
          %vm575 = vcmask 516096
          %576 = vst.msk [vmem:[#allocation3] sm:$0x1] %vm575, %v572
          %v577 = vld [vmem:[%s4] sm:$0xff]
          %v578 = vld [vmem:[%s4 + $0x8] sm:$0xff]
          %v579 = vld [vmem:[%s5] sm:$0xff]
          %v580 = vld [vmem:[%s5 + $0x8] sm:$0xff]
          %582 = vset.pattern.permute.xlu0 0
          %583 = vperm.xlu0 %582, %v579
          %v584 = vpop.permute.xlu0 %583
          %587 = vset.pattern.permute.xlu0 0
          %588 = vperm.xlu0 %587, %v580
          %v589 = vpop.permute.xlu0 %588
          %v592 = vsel %vm416, %v577, 0
          %v595 = vsel %vm416, %v578, 0
          %597 = vmatprep.subr.mxu0 0.0
          %598 = vmatpush1.msra.mxu0 %v412
          %599 = vmatprep.subr.mxu0 0.0
          %600 = vmatpush1.msra.mxu0 %v413
          %601 = vmatprep.subr.mxu0 0.0
          %602 = vmatpush1.msra.mxu0 0.0
          %603 = vmatprep.subr.mxu0 0.0
          %604 = vmatpush1.msra.mxu0 0.0
          %605 = vmatprep.subr.mxu0 0.0
          %606 = vmatpush1.msra.mxu0 0.0
          %607 = vmatprep.subr.mxu0 0.0
          %608 = vmatpush1.msra.mxu0 0.0
          %609 = vmatprep.subr.mxu0 0.0
          %610 = vmatpush1.msra.mxu0 0.0
          %611 = vmatprep.subr.mxu0 0.0
          %612 = vmatpush1.msra.mxu0 0.0
          %613 = vmatprep.subr.mxu0 0.0
          %614 = vmatpush1.msra.mxu0 0.0
          %615 = vmatprep.subr.mxu0 0.0
          %616 = vmatpush1.msra.mxu0 0.0
          %617 = vmatprep.subr.mxu0 0.0
          %618 = vmatpush1.msra.mxu0 0.0
          %619 = vmatprep.subr.mxu0 0.0
          %620 = vmatpush1.msra.mxu0 0.0
          %621 = vmatprep.subr.mxu0 0.0
          %622 = vmatpush1.msra.mxu0 0.0
          %623 = vmatprep.subr.mxu0 0.0
          %624 = vmatpush1.msra.mxu0 0.0
          %625 = vmatprep.subr.mxu0 0.0
          %626 = vmatpush1.msra.mxu0 0.0
          %627 = vmatprep.subr.mxu0 0.0
          %628 = vmatpush1.msra.mxu0 0.0
          %629 = vmatprep.subr.mxu0 0.0
          %630 = vmatpush1.msra.mxu0 0.0
          %631 = vmatprep.subr.mxu0 0.0
          %632 = vmatpush1.msra.mxu0 0.0
          %633 = vmatprep.subr.mxu0 0.0
          %634 = vmatpush1.msra.mxu0 0.0
          %635 = vmatprep.subr.mxu0 0.0
          %636 = vmatpush1.msra.mxu0 0.0
          %637 = vmatprep.subr.mxu0 0.0
          %638 = vmatpush1.msra.mxu0 0.0
          %639 = vmatprep.subr.mxu0 0.0
          %640 = vmatpush1.msra.mxu0 0.0
          %641 = vmatprep.subr.mxu0 0.0
          %642 = vmatpush1.msra.mxu0 0.0
          %643 = vmatprep.subr.mxu0 0.0
          %644 = vmatpush1.msra.mxu0 0.0
          %645 = vmatprep.subr.mxu0 0.0
          %646 = vmatpush1.msra.mxu0 0.0
          %647 = vmatprep.subr.mxu0 0.0
          %648 = vmatpush1.msra.mxu0 0.0
          %649 = vmatprep.subr.mxu0 0.0
          %650 = vmatpush1.msra.mxu0 0.0
          %651 = vmatprep.subr.mxu0 0.0
          %652 = vmatpush1.msra.mxu0 0.0
          %653 = vmatprep.subr.mxu0 0.0
          %654 = vmatpush1.msra.mxu0 0.0
          %655 = vmatprep.subr.mxu0 0.0
          %656 = vmatpush1.msra.mxu0 0.0
          %657 = vmatprep.subr.mxu0 0.0
          %658 = vmatpush1.msra.mxu0 0.0
          %659 = vmatprep.subr.mxu0 0.0
          %660 = vmatpush1.msra.mxu0 0.0
          %661 = vmatprep.mubr.f32.mxu0 0.0
          %662 = vmatmul.mubr.f32.gmra.mrb[0].mxu0 %v592
          %v663 = vpop.f32.mrb[0].mxu0
          %v664 = vadd.f32 %v584, %v663
          %v665 = vpop.f32.mrb[0].mxu0
          %666 = vmatprep.mubr.f32.mxu0 0.0
          %667 = vmatmul.mubr.f32.gmra.mrb[0].mxu0 %v595
          %v668 = vpop.f32.mrb[0].mxu0
          %v669 = vadd.f32 %v589, %v668
          %v670 = vpop.f32.mrb[0].mxu0
          %671 = vdwg.mxu0
          %672 = vst.msk [vmem:[#allocation4] sm:$0xff] %vm498, %v664
          %673 = vst.msk [vmem:[#allocation4 + $0x8] sm:$0xff] %vm498, %v669
        $region64: #{tpu_custom_call.1} parent=47 // pred_fallthru
          _
        %v674 = vld [vmem:[%s351] sm:$0xff]
        %v675 = vld [vmem:[%s351 + $0x8] sm:$0xff]
        %v676 = vld [vmem:[#allocation2] sm:$0xff]
        %v677 = vld [vmem:[#allocation2 + $0x8] sm:$0xff]
        %v678 = vld [vmem:[#allocation3] sm:$0x1]
        %v680 = vlaneseq
        %v681 = vshrl.u32 %v680, 7
        %v682 = vsub.s32 0, %v681
        %v683 = vrot.slane %v678, %v682
        %685 = vxpose.xlu0.b32.start [1/16] %v674, 128
        %686 = vxpose.xlu0.b32.cont [2/16] %v675, 128
        %687 = vxpose.xlu0.b32.cont [3/16] 0.0, 128
        %688 = vxpose.xlu0.b32.cont [4/16] 0.0, 128
        %689 = vxpose.xlu0.b32.cont [5/16] 0.0, 128
        %690 = vxpose.xlu0.b32.cont [6/16] 0.0, 128
        %691 = vxpose.xlu0.b32.cont [7/16] 0.0, 128
        %692 = vxpose.xlu0.b32.cont [8/16] 0.0, 128
        %693 = vxpose.xlu0.b32.cont [9/16] 0.0, 128
        %694 = vxpose.xlu0.b32.cont [10/16] 0.0, 128
        %695 = vxpose.xlu0.b32.cont [11/16] 0.0, 128
        %696 = vxpose.xlu0.b32.cont [12/16] 0.0, 128
        %697 = vxpose.xlu0.b32.cont [13/16] 0.0, 128
        %698 = vxpose.xlu0.b32.cont [14/16] 0.0, 128
        %699 = vxpose.xlu0.b32.cont [15/16] 0.0, 128
        %700 = vxpose.xlu0.b32.end [16/16] 0.0, 128
        %v701 = vpop.trf.xlu0
        %v702 = vpop.trf.xlu0
        %v703 = vpop.trf.xlu0
        %v704 = vpop.trf.xlu0
        %v705 = vpop.trf.xlu0
        %v706 = vpop.trf.xlu0
        %v707 = vpop.trf.xlu0
        %v708 = vpop.trf.xlu0
        %v709 = vpop.trf.xlu0
        %v710 = vpop.trf.xlu0
        %v711 = vpop.trf.xlu0
        %v712 = vpop.trf.xlu0
        %v713 = vpop.trf.xlu0
        %v714 = vpop.trf.xlu0
        %v715 = vpop.trf.xlu0
        %v716 = vpop.trf.xlu0
        %vm717 = vcmask 130048
        %v719 = vsel %vm717, %v701, 0
        %v722 = vsel %vm717, %v702, 0
        %v725 = vsel %vm717, %v703, 0
        %v728 = vsel %vm717, %v704, 0
        %v731 = vsel %vm717, %v705, 0
        %v734 = vsel %vm717, %v706, 0
        %v737 = vsel %vm717, %v707, 0
        %v740 = vsel %vm717, %v708, 0
        %742 = vmatprep.subr.mxu0 0.0
        %743 = vmatpush1.msra.mxu0 %v676
        %744 = vmatprep.subr.mxu0 0.0
        %745 = vmatpush1.msra.mxu0 %v677
        %746 = vmatprep.subr.mxu0 0.0
        %747 = vmatpush1.msra.mxu0 0.0
        %748 = vmatprep.subr.mxu0 0.0
        %749 = vmatpush1.msra.mxu0 0.0
        %750 = vmatprep.subr.mxu0 0.0
        %751 = vmatpush1.msra.mxu0 0.0
        %752 = vmatprep.subr.mxu0 0.0
        %753 = vmatpush1.msra.mxu0 0.0
        %754 = vmatprep.subr.mxu0 0.0
        %755 = vmatpush1.msra.mxu0 0.0
        %756 = vmatprep.subr.mxu0 0.0
        %757 = vmatpush1.msra.mxu0 0.0
        %758 = vmatprep.subr.mxu0 0.0
        %759 = vmatpush1.msra.mxu0 0.0
        %760 = vmatprep.subr.mxu0 0.0
        %761 = vmatpush1.msra.mxu0 0.0
        %762 = vmatprep.subr.mxu0 0.0
        %763 = vmatpush1.msra.mxu0 0.0
        %764 = vmatprep.subr.mxu0 0.0
        %765 = vmatpush1.msra.mxu0 0.0
        %766 = vmatprep.subr.mxu0 0.0
        %767 = vmatpush1.msra.mxu0 0.0
        %768 = vmatprep.subr.mxu0 0.0
        %769 = vmatpush1.msra.mxu0 0.0
        %770 = vmatprep.subr.mxu0 0.0
        %771 = vmatpush1.msra.mxu0 0.0
        %772 = vmatprep.subr.mxu0 0.0
        %773 = vmatpush1.msra.mxu0 0.0
        %774 = vmatprep.subr.mxu0 0.0
        %775 = vmatpush1.msra.mxu0 0.0
        %776 = vmatprep.subr.mxu0 0.0
        %777 = vmatpush1.msra.mxu0 0.0
        %778 = vmatprep.subr.mxu0 0.0
        %779 = vmatpush1.msra.mxu0 0.0
        %780 = vmatprep.subr.mxu0 0.0
        %781 = vmatpush1.msra.mxu0 0.0
        %782 = vmatprep.subr.mxu0 0.0
        %783 = vmatpush1.msra.mxu0 0.0
        %784 = vmatprep.subr.mxu0 0.0
        %785 = vmatpush1.msra.mxu0 0.0
        %786 = vmatprep.subr.mxu0 0.0
        %787 = vmatpush1.msra.mxu0 0.0
        %788 = vmatprep.subr.mxu0 0.0
        %789 = vmatpush1.msra.mxu0 0.0
        %790 = vmatprep.subr.mxu0 0.0
        %791 = vmatpush1.msra.mxu0 0.0
        %792 = vmatprep.subr.mxu0 0.0
        %793 = vmatpush1.msra.mxu0 0.0
        %794 = vmatprep.subr.mxu0 0.0
        %795 = vmatpush1.msra.mxu0 0.0
        %796 = vmatprep.subr.mxu0 0.0
        %797 = vmatpush1.msra.mxu0 0.0
        %798 = vmatprep.subr.mxu0 0.0
        %799 = vmatpush1.msra.mxu0 0.0
        %800 = vmatprep.subr.mxu0 0.0
        %801 = vmatpush1.msra.mxu0 0.0
        %802 = vmatprep.subr.mxu0 0.0
        %803 = vmatpush1.msra.mxu0 0.0
        %804 = vmatprep.subr.mxu0 0.0
        %805 = vmatpush1.msra.mxu0 0.0
        %806 = vmatprep.mubr.f32.mxu0 0.0
        %807 = vmatmul.mubr.f32.gmra.mrb[0].mxu0 %v719
        %v808 = vpop.f32.mrb[0].mxu0
        %v809 = vadd.f32 %v683, %v808
        %v810 = vpop.f32.mrb[0].mxu0
        %811 = vmatprep.mubr.f32.mxu0 0.0
        %812 = vmatmul.mubr.f32.gmra.mrb[0].mxu0 %v722
        %v813 = vpop.f32.mrb[0].mxu0
        %v814 = vadd.f32 %v683, %v813
        %v815 = vpop.f32.mrb[0].mxu0
        %816 = vmatprep.mubr.f32.mxu0 0.0
        %817 = vmatmul.mubr.f32.gmra.mrb[0].mxu0 %v725
        %v818 = vpop.f32.mrb[0].mxu0
        %v819 = vadd.f32 %v683, %v818
        %v820 = vpop.f32.mrb[0].mxu0
        %821 = vmatprep.mubr.f32.mxu0 0.0
        %822 = vmatmul.mubr.f32.gmra.mrb[0].mxu0 %v728
        %v823 = vpop.f32.mrb[0].mxu0
        %v824 = vadd.f32 %v683, %v823
        %v825 = vpop.f32.mrb[0].mxu0
        %826 = vmatprep.mubr.f32.mxu0 0.0
        %827 = vmatmul.mubr.f32.gmra.mrb[0].mxu0 %v731
        %v828 = vpop.f32.mrb[0].mxu0
        %v829 = vadd.f32 %v683, %v828
        %v830 = vpop.f32.mrb[0].mxu0
        %831 = vmatprep.mubr.f32.mxu0 0.0
        %832 = vmatmul.mubr.f32.gmra.mrb[0].mxu0 %v734
        %v833 = vpop.f32.mrb[0].mxu0
        %v834 = vadd.f32 %v683, %v833
        %v835 = vpop.f32.mrb[0].mxu0
        %836 = vmatprep.mubr.f32.mxu0 0.0
        %837 = vmatmul.mubr.f32.gmra.mrb[0].mxu0 %v737
        %v838 = vpop.f32.mrb[0].mxu0
        %v839 = vadd.f32 %v683, %v838
        %v840 = vpop.f32.mrb[0].mxu0
        %841 = vmatprep.mubr.f32.mxu0 0.0
        %842 = vmatmul.mubr.f32.gmra.mrb[0].mxu0 %v740
        %v843 = vpop.f32.mrb[0].mxu0
        %v844 = vadd.f32 %v683, %v843
        %v845 = vpop.f32.mrb[0].mxu0
        %846 = vdwg.mxu0
        %vm847 = vcmask 523264
        %v848 = vsel %vm847, %v809, -inf
        %849 = vmax.xlane.f32.xlu0 %v848
        %v850 = vpop.xlane.xlu0 %849
        %v851 = vsel %vm847, %v814, -inf
        %852 = vmax.xlane.f32.xlu0 %v851
        %v853 = vpop.xlane.xlu0 %852
        %v854 = vsel %vm847, %v819, -inf
        %855 = vmax.xlane.f32.xlu0 %v854
        %v856 = vpop.xlane.xlu0 %855
        %v857 = vsel %vm847, %v824, -inf
        %858 = vmax.xlane.f32.xlu0 %v857
        %v859 = vpop.xlane.xlu0 %858
        %v860 = vsel %vm847, %v829, -inf
        %861 = vmax.xlane.f32.xlu0 %v860
        %v862 = vpop.xlane.xlu0 %861
        %v863 = vsel %vm847, %v834, -inf
        %864 = vmax.xlane.f32.xlu0 %v863
        %v865 = vpop.xlane.xlu0 %864
        %v866 = vsel %vm847, %v839, -inf
        %867 = vmax.xlane.f32.xlu0 %v866
        %v868 = vpop.xlane.xlu0 %867
        %v869 = vsel %vm847, %v844, -inf
        %870 = vmax.xlane.f32.xlu0 %v869
        %v871 = vpop.xlane.xlu0 %870
        %v872 = vsub.f32 %v809, %v850
        %v873 = vsub.f32 %v814, %v853
        %v874 = vsub.f32 %v819, %v856
        %v875 = vsub.f32 %v824, %v859
        %v876 = vsub.f32 %v829, %v862
        %v877 = vsub.f32 %v834, %v865
        %v878 = vsub.f32 %v839, %v868
        %v879 = vsub.f32 %v844, %v871
        %v880 = vmul.f32 %v872, 1.442695
        %v881 = vpow.pop %v880
        %v882 = vmul.f32 %v873, 1.442695
        %v883 = vpow.pop %v882
        %v884 = vmul.f32 %v874, 1.442695
        %v885 = vpow.pop %v884
        %v886 = vmul.f32 %v875, 1.442695
        %v887 = vpow.pop %v886
        %v888 = vmul.f32 %v876, 1.442695
        %v889 = vpow.pop %v888
        %v890 = vmul.f32 %v877, 1.442695
        %v891 = vpow.pop %v890
        %v892 = vmul.f32 %v878, 1.442695
        %v893 = vpow.pop %v892
        %v894 = vmul.f32 %v879, 1.442695
        %v895 = vpow.pop %v894
        %v896 = vsel %vm847, %v881, 0.0
        %897 = vadd.xlane.f32.xlu0 %v896
        %v898 = vpop.xlane.xlu0 %897
        %v899 = vsel %vm847, %v883, 0.0
        %900 = vadd.xlane.f32.xlu0 %v899
        %v901 = vpop.xlane.xlu0 %900
        %v902 = vsel %vm847, %v885, 0.0
        %903 = vadd.xlane.f32.xlu0 %v902
        %v904 = vpop.xlane.xlu0 %903
        %v905 = vsel %vm847, %v887, 0.0
        %906 = vadd.xlane.f32.xlu0 %v905
        %v907 = vpop.xlane.xlu0 %906
        %v908 = vsel %vm847, %v889, 0.0
        %909 = vadd.xlane.f32.xlu0 %v908
        %v910 = vpop.xlane.xlu0 %909
        %v911 = vsel %vm847, %v891, 0.0
        %912 = vadd.xlane.f32.xlu0 %v911
        %v913 = vpop.xlane.xlu0 %912
        %v914 = vsel %vm847, %v893, 0.0
        %915 = vadd.xlane.f32.xlu0 %v914
        %v916 = vpop.xlane.xlu0 %915
        %v917 = vsel %vm847, %v895, 0.0
        %918 = vadd.xlane.f32.xlu0 %v917
        %v919 = vpop.xlane.xlu0 %918
        %v920 = vrcp.pop %v898
        %v921 = vrcp.pop %v901
        %v922 = vrcp.pop %v904
        %v923 = vrcp.pop %v907
        %v924 = vrcp.pop %v910
        %v925 = vrcp.pop %v913
        %v926 = vrcp.pop %v916
        %v927 = vrcp.pop %v919
        %v928 = vmul.f32 %v881, %v920
        %v929 = vmul.f32 %v883, %v921
        %v930 = vmul.f32 %v885, %v922
        %v931 = vmul.f32 %v887, %v923
        %v932 = vmul.f32 %v889, %v924
        %v933 = vmul.f32 %v891, %v925
        %v934 = vmul.f32 %v893, %v926
        %v935 = vmul.f32 %v895, %v927
        %936 = vst.msk [vmem:[%s406] sm:$0xff] %vm847, %v928
        %937 = vst.msk [vmem:[%s406 + $0x8] sm:$0xff] %vm847, %v929
        %938 = vst.msk [vmem:[%s406 + $0x10] sm:$0xff] %vm847, %v930
        %939 = vst.msk [vmem:[%s406 + $0x18] sm:$0xff] %vm847, %v931
        %940 = vst.msk [vmem:[%s406 + $0x20] sm:$0xff] %vm847, %v932
        %941 = vst.msk [vmem:[%s406 + $0x28] sm:$0xff] %vm847, %v933
        %942 = vst.msk [vmem:[%s406 + $0x30] sm:$0xff] %vm847, %v934
        %943 = vst.msk [vmem:[%s406 + $0x38] sm:$0xff] %vm847, %v935
        %v944 = vld [vmem:[#allocation4] sm:$0xff]
        %v945 = vld [vmem:[#allocation4 + $0x8] sm:$0xff]
        %v947 = vsel %vm847, %v944, 0
        %v950 = vsel %vm847, %v945, 0
        %v953 = vsel %vm847, %v928, 0
        %v956 = vsel %vm847, %v929, 0
        %v959 = vsel %vm847, %v930, 0
        %v962 = vsel %vm847, %v931, 0
        %v965 = vsel %vm847, %v932, 0
        %v968 = vsel %vm847, %v933, 0
        %v971 = vsel %vm847, %v934, 0
        %v974 = vsel %vm847, %v935, 0
        %976 = vmatprep.subr.mxu0 0.0
        %977 = vmatpush1.xpose.msra.mxu0 %v953
        %978 = vmatprep.subr.mxu0 0.0
        %979 = vmatpush1.xpose.msra.mxu0 %v956
        %980 = vmatprep.subr.mxu0 0.0
        %981 = vmatpush1.xpose.msra.mxu0 %v959
        %982 = vmatprep.subr.mxu0 0.0
        %983 = vmatpush1.xpose.msra.mxu0 %v962
        %984 = vmatprep.subr.mxu0 0.0
        %985 = vmatpush1.xpose.msra.mxu0 %v965
        %986 = vmatprep.subr.mxu0 0.0
        %987 = vmatpush1.xpose.msra.mxu0 %v968
        %988 = vmatprep.subr.mxu0 0.0
        %989 = vmatpush1.xpose.msra.mxu0 %v971
        %990 = vmatprep.subr.mxu0 0.0
        %991 = vmatpush1.xpose.msra.mxu0 %v974
        %992 = vmatprep.subr.mxu0 0.0
        %993 = vmatpush1.xpose.msra.mxu0 0.0
        %994 = vmatprep.subr.mxu0 0.0
        %995 = vmatpush1.xpose.msra.mxu0 0.0
        %996 = vmatprep.subr.mxu0 0.0
        %997 = vmatpush1.xpose.msra.mxu0 0.0
        %998 = vmatprep.subr.mxu0 0.0
        %999 = vmatpush1.xpose.msra.mxu0 0.0
        %1000 = vmatprep.subr.mxu0 0.0
        %1001 = vmatpush1.xpose.msra.mxu0 0.0
        %1002 = vmatprep.subr.mxu0 0.0
        %1003 = vmatpush1.xpose.msra.mxu0 0.0
        %1004 = vmatprep.subr.mxu0 0.0
        %1005 = vmatpush1.xpose.msra.mxu0 0.0
        %1006 = vmatprep.subr.mxu0 0.0
        %1007 = vmatpush1.xpose.msra.mxu0 0.0
        %1008 = vmatprep.subr.mxu0 0.0
        %1009 = vmatpush1.xpose.msra.mxu0 0.0
        %1010 = vmatprep.subr.mxu0 0.0
        %1011 = vmatpush1.xpose.msra.mxu0 0.0
        %1012 = vmatprep.subr.mxu0 0.0
        %1013 = vmatpush1.xpose.msra.mxu0 0.0
        %1014 = vmatprep.subr.mxu0 0.0
        %1015 = vmatpush1.xpose.msra.mxu0 0.0
        %1016 = vmatprep.subr.mxu0 0.0
        %1017 = vmatpush1.xpose.msra.mxu0 0.0
        %1018 = vmatprep.subr.mxu0 0.0
        %1019 = vmatpush1.xpose.msra.mxu0 0.0
        %1020 = vmatprep.subr.mxu0 0.0
        %1021 = vmatpush1.xpose.msra.mxu0 0.0
        %1022 = vmatprep.subr.mxu0 0.0
        %1023 = vmatpush1.xpose.msra.mxu0 0.0
        %1024 = vmatprep.subr.mxu0 0.0
        %1025 = vmatpush1.xpose.msra.mxu0 0.0
        %1026 = vmatprep.subr.mxu0 0.0
        %1027 = vmatpush1.xpose.msra.mxu0 0.0
        %1028 = vmatprep.subr.mxu0 0.0
        %1029 = vmatpush1.xpose.msra.mxu0 0.0
        %1030 = vmatprep.subr.mxu0 0.0
        %1031 = vmatpush1.xpose.msra.mxu0 0.0
        %1032 = vmatprep.subr.mxu0 0.0
        %1033 = vmatpush1.xpose.msra.mxu0 0.0
        %1034 = vmatprep.subr.mxu0 0.0
        %1035 = vmatpush1.xpose.msra.mxu0 0.0
        %1036 = vmatprep.subr.mxu0 0.0
        %1037 = vmatpush1.xpose.msra.mxu0 0.0
        %1038 = vmatprep.subr.mxu0 0.0
        %1039 = vmatpush1.xpose.msra.mxu0 0.0
        %1040 = vmatprep.mubr.f32.mxu0 0.0
        %1041 = vmatmul.mubr.f32.gmra.mrb[0].mxu0 %v947
        %v1042 = vpop.f32.mrb[0].mxu0
        %v1043 = vadd.f32 0.0, %v1042
        %v1044 = vpop.f32.mrb[0].mxu0
        %1045 = vmatprep.mubr.f32.mxu0 0.0
        %1046 = vmatmul.mubr.f32.gmra.mrb[0].mxu0 %v950
        %v1047 = vpop.f32.mrb[0].mxu0
        %v1048 = vadd.f32 0.0, %v1047
        %v1049 = vpop.f32.mrb[0].mxu0
        %1050 = vdwg.mxu0
        %s1051 = sld [smem:[#allocation5]]
        %v1052 = vstv %s1051
        %v1053 = vmul.f32 %v1052, %v1043
        %v1054 = vmul.f32 %v1052, %v1048
        %v1055 = vadd.f32 %v1053, %v674
        %v1056 = vadd.f32 %v1054, %v675
        %1057 = vst.msk [vmem:[%s399] sm:$0xff] %vm847, %v1055
        %1058 = vst.msk [vmem:[%s399 + $0x8] sm:$0xff] %vm847, %v1056
        %s1059 = sand.u32 %s214, 1
        %s1060 = scalar_lea.sflag [#allocation8], %s1059
        %s1061 = sand.u32 %s214, 1
        %s1062 = smul.addr %s1061, 16
        %s1063 = scalar_lea.vmem [#allocation12], %s1062
        %s1064 = sand.u32 %s242, 1
        %s1065 = scalar_lea.sflag [#allocation14], %s1064
        %s1066 = sand.u32 %s242, 1
        %s1067 = smul.addr %s1066, 64
        %s1068 = scalar_lea.vmem [#allocation13], %s1067
        // Predicated region
        $region65: #{tpu_custom_call.1} parent=47 // pred_check
          %p1069 = pneg %p224
        $region66: #{tpu_custom_call.1} parent=47 // pred_check_branch
          %1071 = sbr.rel (%p1069) target = $region68
        $region67: #{tpu_custom_call.1} parent=47 // pred_region
          %s1073 = ssub.s32 256, 256
          %1074 = vsyncadd %s1060, %s1073
          %s1075 = smul.addr %s37, 2
          %s1076 = sadd.s32 %s38, %s1075
          %s1077 = smul.addr %s1076, 128
          %s1078 = scalar_lea.hbm %s7, %s1077
          %s1079 = sshll.u32 %s1063, 4
          %s1080 = int_to_ptr.vmem [resolvable:$true] %s1079
          %1085 = dma.vmem_to_hbm [thread:$0]  %s1080, 256, %s1078, %s1060, 128, 128, 8
        $region68: #{tpu_custom_call.1} parent=47 // pred_fallthru
          _
        // Predicated region
        $region69: #{tpu_custom_call.1} parent=47 // pred_check
          %p1086 = pneg %p252
        $region70: #{tpu_custom_call.1} parent=47 // pred_check_branch
          %1088 = sbr.rel (%p1086) target = $region72
        $region71: #{tpu_custom_call.1} parent=47 // pred_region
          %s1089 = smul.u32 8, %s38
          %s1091 = ssub.s32 1024, 1024
          %1092 = vsyncadd %s1065, %s1091
          %s1093 = smul.addr %s37, 8
          %s1094 = sadd.s32 %s1089, %s1093
          %s1095 = smul.addr %s1094, 128
          %s1096 = scalar_lea.hbm %s8, %s1095
          %s1097 = sshll.u32 %s1068, 4
          %s1098 = int_to_ptr.vmem [resolvable:$true] %s1097
          %1103 = dma.vmem_to_hbm [thread:$0]  %s1098, 1024, %s1096, %s1065, 128, 128, 8
        $region72: #{tpu_custom_call.1} parent=47 // pred_fallthru
          _
      $region48: #{tpu_custom_call.1} parent=5 // pred_fallthru
        _
      %p1104 = scmp.le.s32.totalorder 2, %s28
      // Predicated region
      $region73: #{tpu_custom_call.1} parent=5 // pred_check
        %p1105 = pneg %p1104
      $region74: #{tpu_custom_call.1} parent=5 // pred_check_branch
        %1107 = sbr.rel (%p1105) target = $region76
      $region75: #{tpu_custom_call.1} parent=5 // pred_region
        %s1108 = ssub.s32 %s28, 2
        // Predicated region
        $region77: #{tpu_custom_call.1} parent=75 // pred_check
          %p1109 = pneg %p230
        $region78: #{tpu_custom_call.1} parent=75 // pred_check_branch
          %1111 = sbr.rel (%p1109) target = $region80
        $region79: #{tpu_custom_call.1} parent=75 // pred_region
          %s1112 = sand.u32 %s215, 1
          %s1113 = scalar_lea.sflag [#allocation8], %s1112
          %s1114 = sand.u32 %s215, 1
          %s1115 = smul.addr %s1114, 16
          %s1116 = scalar_lea.vmem [#allocation12], %s1115
          %1117 = dma.done %s1113, 256
        $region80: #{tpu_custom_call.1} parent=75 // pred_fallthru
          _
        // Predicated region
        $region81: #{tpu_custom_call.1} parent=75 // pred_check
          %p1118 = pneg %p258
        $region82: #{tpu_custom_call.1} parent=75 // pred_check_branch
          %1120 = sbr.rel (%p1118) target = $region84
        $region83: #{tpu_custom_call.1} parent=75 // pred_region
          %s1121 = sand.u32 %s243, 1
          %s1122 = scalar_lea.sflag [#allocation14], %s1121
          %s1123 = sand.u32 %s243, 1
          %s1124 = smul.addr %s1123, 64
          %s1125 = scalar_lea.vmem [#allocation13], %s1124
          %1126 = dma.done %s1122, 1024
        $region84: #{tpu_custom_call.1} parent=75 // pred_fallthru
          _
      $region76: #{tpu_custom_call.1} parent=5 // pred_fallthru
        _
    $region6: #{tpu_custom_call.1} parent=1 // loop_footer
      %s32 = sadd.s32 1, %s28
    $region7: #{tpu_custom_call.1} parent=1 // loop_footer_branch
      %27 = sbr.rel target = $region3
    $region8: #{tpu_custom_call.1} parent=1 // loop_exit
      _
    %1127 = vsyncpa [#allocation7], 1
    %s1128 = scalar_lea.sflag [#allocation7], 1
    %1129 = vsyncpa %s1128, 1
    %1130 = vsyncpa [#allocation10], 1
    %s1131 = scalar_lea.sflag [#allocation10], 1
    %1132 = vsyncpa %s1131, 1
    %1133 = vsyncpa [#allocation8], 1
    %s1134 = scalar_lea.sflag [#allocation8], 1
    %1135 = vsyncpa %s1134, 1
    %1136 = vsyncpa [#allocation14], 1
    %s1137 = scalar_lea.sflag [#allocation14], 1
    %1138 = vsyncpa %s1137, 1

</llo_original>
